<compile_context>
chip_gen: v5e
topology: v5e:2x2
jax: 0.10.0
libtpu: 0.0.40
codegen_flags: <defaults>
</compile_context>

<pallas_src>
import functools

import jax
import jax.numpy as jnp
from jax.experimental import pallas as pl
from jax.experimental.pallas import tpu as pltpu


def _round_up(x, m):
    return ((x + m - 1) // m) * m


def _ccql_kernel(x_ref, t_ref, o_ref, m_acc, s_acc, pick_acc, *, alpha, tile_c):
    """Grid = (row_blocks, class_blocks); the class axis is the reduction axis."""
    k = pl.program_id(1)
    nk = pl.num_programs(1)

    @pl.when(k == 0)
    def _init():
        m_acc[...] = jnp.full(m_acc.shape, -jnp.inf, dtype=m_acc.dtype)
        s_acc[...] = jnp.zeros(s_acc.shape, dtype=s_acc.dtype)
        pick_acc[...] = jnp.zeros(pick_acc.shape, dtype=pick_acc.dtype)

    x_raw = x_ref[...]                           # (tile_n, tile_c), input dtype
    x = x_raw.astype(jnp.float32)
    tn, tc = x.shape

    # Online (flash-style) logsumexp over the class axis. The block max runs in
    # the input dtype (native bf16 VPU path on v6e/v7x), upcast afterwards.
    blk_max = jnp.max(x_raw, axis=-1, keepdims=True).astype(jnp.float32)
    m_old = m_acc[...]                           # (tile_n, 1)
    m_new = jnp.maximum(m_old, blk_max)
    # exp(-inf - finite) == 0 makes the k == 0 rescale a no-op.
    s_acc[...] = s_acc[...] * jnp.exp(m_old - m_new) + jnp.sum(
        jnp.exp(x - m_new), axis=-1, keepdims=True)
    m_acc[...] = m_new

    # Target-logit pick: compare a lane-only iota (constant per block) against
    # the block-shifted target; the k*tile_c shift is a scalar op applied to
    # the (tile_n, 1) target column, not a per-element add on the full tile.
    lane_ids = jax.lax.broadcasted_iota(jnp.int32, (tn, tc), 1)
    tgt_local = t_ref[...] - k * tile_c          # (tile_n, 1) int32
    pick_acc[...] += jnp.sum(
        jnp.where(lane_ids == tgt_local, x, 0.0), axis=-1, keepdims=True)

    @pl.when(k == nk - 1)
    def _finalize():
        lse = m_acc[...] + jnp.log(s_acc[...])
        ce = lse - pick_acc[...]                 # per-row cross entropy
        p = jnp.exp(-ce)
        loss = alpha * ce - (1.0 - alpha) * (p + 0.5 * p * p)
        o_ref[...] = loss.astype(o_ref.dtype)


def _vmem_limit_bytes():
    """Generation-aware scoped-VMEM limit (per TensorCore)."""
    mib = 1024 * 1024
    cap = None
    try:
        cap = getattr(pltpu.get_tpu_info(), "vmem_capacity_bytes", None)
    except Exception:
        cap = None
    if cap is not None and cap >= 96 * mib:
        return 64 * mib                      # v5e / v6e: 128 MiB physical VMEM
    if cap is not None:
        return min(44 * mib, int(cap * 0.68))  # v7x: 64 MiB physical VMEM
    return 40 * mib                          # unknown: stay conservative


def _plan(n, c, itemsize, tile_n=None, tile_c=None):
    vmem_limit = _vmem_limit_bytes()

    # Class tile: whole row when it fits, otherwise stream 2048-wide blocks.
    if tile_c is None:
        tile_c = c if c <= 4096 else 2048
    if tile_c >= c:
        tile_c = c                           # single block: full last dim is legal
    else:
        tile_c = min(_round_up(tile_c, 128), _round_up(c, 128))
        if tile_c >= c:
            tile_c = c
    c_pad = c if tile_c == c else _round_up(c, tile_c)
    nk = c_pad // tile_c
    # Deeper buffering hides the latency of many small strided row-segment DMAs.
    buffer_count = 3 if nk >= 3 else 2

    # Row tile: fit pipelined logits buffers + ~4 f32 in-kernel temporaries per
    # element + lane-padded per-row buffers into ~80% of the VMEM limit.
    per_row_bytes = (buffer_count * tile_c * itemsize   # pipelined input blocks
                     + 16 * tile_c                      # ~4x f32 tile temporaries
                     + (2 + 2 + 3) * 128 * 4)           # out/target dbuf + 3 accs
    budget = int(vmem_limit * 0.8)
    max_rows = max(8, budget // per_row_bytes)

    if tile_n is None:
        tile_n = min(2048, max_rows, _round_up(n, 8))
        # Keep >= 2 row blocks so v7x can shard the "parallel" axis over 2 TCs;
        # the extra grid step is noise on v5e/v6e.
        if n > 8:
            tile_n = min(tile_n, _round_up((n + 1) // 2, 8))
    tile_n = max(8, (tile_n // 8) * 8)

    return tile_n, tile_c, c_pad, nk, buffer_count, vmem_limit


def ccql_loss(logits, target, *, alpha=1.0, reduction="none",
              tile_n=None, tile_c=None):
    """CCQL forward: taylor_exp(cross_entropy(logits, target), alpha)."""
    n, c = logits.shape
    itemsize = jnp.dtype(logits.dtype).itemsize
    tile_n, tile_c, c_pad, nk, buffer_count, vmem_limit = _plan(
        n, c, itemsize, tile_n, tile_c)

    target = target.astype(jnp.int32)
    # Class padding uses a large *finite* negative so padded columns vanish
    # from both the running max and the exp-sum with no in-kernel mask and no
    # -inf - (-inf) = NaN hazard.
    if c_pad != c:
        pad_val = float(jnp.finfo(logits.dtype).min) / 2.0
        logits = jnp.pad(logits, ((0, 0), (0, c_pad - c)),
                         constant_values=pad_val)
    # Ragged N: pad rows (zeros) and slice the result back afterwards.
    n_pad = _round_up(n, tile_n)
    if n_pad != n:
        logits = jnp.pad(logits, ((0, n_pad - n), (0, 0)))
        target = jnp.pad(target, (0, n_pad - n))
    target2d = target.reshape(n_pad, 1)

    kernel = functools.partial(_ccql_kernel, alpha=float(alpha), tile_c=tile_c)
    grid = (n_pad // tile_n, nk)

    x_map = lambda i, k: (i, k)
    if buffer_count > 2:
        x_spec = pl.BlockSpec((tile_n, tile_c), x_map,
                              pipeline_mode=pl.Buffered(buffer_count))
    else:
        x_spec = pl.BlockSpec((tile_n, tile_c), x_map)

    out2d = pl.pallas_call(
        kernel,
        out_shape=jax.ShapeDtypeStruct((n_pad, 1), jnp.float32),
        grid_spec=pltpu.PrefetchScalarGridSpec(
            num_scalar_prefetch=0,
            grid=grid,
            in_specs=[
                x_spec,
                pl.BlockSpec((tile_n, 1), lambda i, k: (i, 0)),
            ],
            out_specs=pl.BlockSpec((tile_n, 1), lambda i, k: (i, 0)),
            scratch_shapes=[
                pltpu.VMEM((tile_n, 1), jnp.float32),  # running max
                pltpu.VMEM((tile_n, 1), jnp.float32),  # running exp-sum
                pltpu.VMEM((tile_n, 1), jnp.float32),  # picked target logit
            ],
        ),
        compiler_params=pltpu.CompilerParams(
            dimension_semantics=("parallel", "arbitrary"),
            vmem_limit_bytes=vmem_limit,
        ),
    )(logits, target2d)

    loss = out2d[:n, 0]
    if reduction == "none":
        return loss
    if reduction == "mean":
        return loss.mean()
    if reduction == "sum":
        return loss.sum()
    raise ValueError("Invalid reduction option. Use 'none', 'mean', or 'sum'.")


def _reference_ccql(logits, target, alpha=1.0):
    # Pure-JAX reference (f32 math, matching the kernel's in-kernel upcast).
    logits = logits.astype(jnp.float32)
    lse = jax.nn.logsumexp(logits, axis=-1)
    picked = jnp.take_along_axis(
        logits, target[:, None].astype(jnp.int32), axis=-1)[:, 0]
    ce = lse - picked
    p = jnp.exp(-ce)
    return alpha * ce - (1.0 - alpha) * (p + p * p / 2.0)


if __name__ == "__main__":
    key = jax.random.PRNGKey(0)

    # 1) Small f32 case matching the module's (batch, classes) convention.
    k1, k2 = jax.random.split(key)
    N, C = 16, 32
    logits = jax.random.normal(k1, (N, C), dtype=jnp.float32)
    target = jax.random.randint(k2, (N,), 0, C, dtype=jnp.int32)
    out = ccql_loss(logits, target, alpha=1.0)
    jax.block_until_ready(out)
    ref = _reference_ccql(logits, target, alpha=1.0)
    assert out.shape == (N,)
    assert jnp.allclose(out, ref, atol=1e-4, rtol=1e-5), (out, ref)

    # 2) Ragged N (not a multiple of the tile), bf16 logits, alpha != 1.
    k3, k4 = jax.random.split(k1)
    N2, C2 = 300, 32
    logits2 = jax.random.normal(k3, (N2, C2), dtype=jnp.float32).astype(jnp.bfloat16)
    target2 = jax.random.randint(k4, (N2,), 0, C2, dtype=jnp.int32)
    out2 = ccql_loss(logits2, target2, alpha=0.25)
    jax.block_until_ready(out2)
    ref2 = _reference_ccql(logits2, target2, alpha=0.25)
    assert out2.shape == (N2,)
    assert jnp.allclose(out2, ref2, atol=1e-4, rtol=1e-4), (out2, ref2)

    # 3) Class-axis streaming path (multiple class blocks per row block).
    k5, k6 = jax.random.split(k3)
    N3, C3 = 64, 256
    logits3 = jax.random.normal(k5, (N3, C3), dtype=jnp.float32)
    target3 = jax.random.randint(k6, (N3,), 0, C3, dtype=jnp.int32)
    out3 = ccql_loss(logits3, target3, alpha=0.5, tile_c=128)
    jax.block_until_ready(out3)
    ref3 = _reference_ccql(logits3, target3, alpha=0.5)
    assert jnp.allclose(out3, ref3, atol=1e-4, rtol=1e-5), (out3, ref3)

    # 4) Odd class count (class-axis padding) + >=3 class blocks (Buffered(3))
    #    + ragged N, all at once.
    k7, k8 = jax.random.split(k5)
    N4, C4 = 100, 600
    logits4 = jax.random.normal(k7, (N4, C4), dtype=jnp.float32)
    target4 = jax.random.randint(k8, (N4,), 0, C4, dtype=jnp.int32)
    out4 = ccql_loss(logits4, target4, alpha=0.75, tile_c=128)
    jax.block_until_ready(out4)
    ref4 = _reference_ccql(logits4, target4, alpha=0.75)
    assert out4.shape == (N4,)
    assert jnp.allclose(out4, ref4, atol=1e-4, rtol=1e-5), (out4, ref4)

    print("KERNEL_OK")
</pallas_src>

<mosaic_0001>
module attributes {stable_mosaic.version = 11 : i64} {
  func.func @_ccql_kernel(%arg0: i32, %arg1: i32, %arg2: memref<8x32xf32, #tpu.memory_space<vmem>>, %arg3: memref<8x1xi32, #tpu.memory_space<vmem>>, %arg4: memref<8x1xf32, #tpu.memory_space<vmem>>, %arg5: memref<8x1xf32, #tpu.memory_space<vmem>>, %arg6: memref<8x1xf32, #tpu.memory_space<vmem>>, %arg7: memref<8x1xf32, #tpu.memory_space<vmem>>) attributes {dimension_semantics = [#tpu.dimension_semantics<parallel>, #tpu.dimension_semantics<arbitrary>], iteration_bounds = array<i64: 2, 1>, scalar_prefetch = 0 : i64, scratch_operands = 3 : i64, tpu.core_type = #tpu.core_type<tc>, window_params = [{transform_indices = @transform_0, window_bounds = array<i64: 8, 32>}, {transform_indices = @transform_1, window_bounds = array<i64: 8, 1>}, {transform_indices = @transform_2, window_bounds = array<i64: 8, 1>}]} {
    %c0_i32 = arith.constant 0 : i32
    %0 = arith.cmpi eq, %arg1, %c0_i32 : i32
    %1 = arith.extui %0 : i1 to i32
    %c0_i32_0 = arith.constant 0 : i32
    %2 = arith.cmpi ne, %1, %c0_i32_0 : i32
    scf.if %2 {
      %cst_21 = arith.constant 0xFF800000 : f32
      %37 = vector.broadcast %cst_21 : f32 to vector<8x1xf32>
      %c0_22 = arith.constant 0 : index
      %c0_23 = arith.constant 0 : index
      %38 = vector.load %arg5[%c0_22, %c0_23] : memref<8x1xf32, #tpu.memory_space<vmem>>, vector<8x1xf32>
      tpu.vector_store %arg5[%c0_22, %c0_23], %37 {strides = array<i32>} : memref<8x1xf32, #tpu.memory_space<vmem>>, vector<8x1xf32>,
      %cst_24 = arith.constant 0.000000e+00 : f32
      %39 = vector.broadcast %cst_24 : f32 to vector<8x1xf32>
      %c0_25 = arith.constant 0 : index
      %c0_26 = arith.constant 0 : index
      %40 = vector.load %arg6[%c0_25, %c0_26] : memref<8x1xf32, #tpu.memory_space<vmem>>, vector<8x1xf32>
      tpu.vector_store %arg6[%c0_25, %c0_26], %39 {strides = array<i32>} : memref<8x1xf32, #tpu.memory_space<vmem>>, vector<8x1xf32>,
      %cst_27 = arith.constant 0.000000e+00 : f32
      %41 = vector.broadcast %cst_27 : f32 to vector<8x1xf32>
      %c0_28 = arith.constant 0 : index
      %c0_29 = arith.constant 0 : index
      %42 = vector.load %arg7[%c0_28, %c0_29] : memref<8x1xf32, #tpu.memory_space<vmem>>, vector<8x1xf32>
      tpu.vector_store %arg7[%c0_28, %c0_29], %41 {strides = array<i32>} : memref<8x1xf32, #tpu.memory_space<vmem>>, vector<8x1xf32>,
    } else {
    }
    %c0 = arith.constant 0 : index
    %c0_1 = arith.constant 0 : index
    %3 = vector.load %arg2[%c0, %c0_1] : memref<8x32xf32, #tpu.memory_space<vmem>>, vector<8x32xf32>
    %cst = arith.constant dense<0xFF800000> : vector<8xf32>
    %4 = vector.multi_reduction <maximumf>, %3, %cst [1] : vector<8x32xf32> to vector<8xf32>
    %5 = vector.shape_cast %4 : vector<8xf32> to vector<8x1xf32>
    %c0_2 = arith.constant 0 : index
    %c0_3 = arith.constant 0 : index
    %6 = vector.load %arg5[%c0_2, %c0_3] : memref<8x1xf32, #tpu.memory_space<vmem>>, vector<8x1xf32>
    %7 = arith.maximumf %6, %5 : vector<8x1xf32>
    %c0_4 = arith.constant 0 : index
    %c0_5 = arith.constant 0 : index
    %8 = vector.load %arg6[%c0_4, %c0_5] : memref<8x1xf32, #tpu.memory_space<vmem>>, vector<8x1xf32>
    %9 = arith.subf %6, %7 : vector<8x1xf32>
    %10 = math.exp %9 : vector<8x1xf32>
    %11 = arith.mulf %8, %10 : vector<8x1xf32>
    %12 = vector.broadcast %7 : vector<8x1xf32> to vector<8x32xf32>
    %13 = arith.subf %3, %12 : vector<8x32xf32>
    %14 = math.exp %13 : vector<8x32xf32>
    %cst_6 = arith.constant dense<0.000000e+00> : vector<8xf32>
    %15 = vector.multi_reduction <add>, %14, %cst_6 [1] : vector<8x32xf32> to vector<8xf32>
    %16 = vector.shape_cast %15 : vector<8xf32> to vector<8x1xf32>
    %17 = arith.addf %11, %16 : vector<8x1xf32>
    %c0_7 = arith.constant 0 : index
    %c0_8 = arith.constant 0 : index
    %18 = vector.load %arg6[%c0_7, %c0_8] : memref<8x1xf32, #tpu.memory_space<vmem>>, vector<8x1xf32>
    tpu.vector_store %arg6[%c0_7, %c0_8], %17 {strides = array<i32>} : memref<8x1xf32, #tpu.memory_space<vmem>>, vector<8x1xf32>,
    %c0_9 = arith.constant 0 : index
    %c0_10 = arith.constant 0 : index
    %19 = vector.load %arg5[%c0_9, %c0_10] : memref<8x1xf32, #tpu.memory_space<vmem>>, vector<8x1xf32>
    tpu.vector_store %arg5[%c0_9, %c0_10], %7 {strides = array<i32>} : memref<8x1xf32, #tpu.memory_space<vmem>>, vector<8x1xf32>,
    %20 = tpu.iota {dimensions = array<i32: 1>} : vector<8x32xi32>
    %c0_11 = arith.constant 0 : index
    %c0_12 = arith.constant 0 : index
    %21 = vector.load %arg3[%c0_11, %c0_12] : memref<8x1xi32, #tpu.memory_space<vmem>>, vector<8x1xi32>
    %c32_i32 = arith.constant 32 : i32
    %22 = arith.muli %arg1, %c32_i32 : i32
    %23 = vector.broadcast %22 : i32 to vector<8x1xi32>
    %24 = arith.subi %21, %23 : vector<8x1xi32>
    %c0_13 = arith.constant 0 : index
    %c0_14 = arith.constant 0 : index
    %25 = vector.load %arg7[%c0_13, %c0_14] : memref<8x1xf32, #tpu.memory_space<vmem>>, vector<8x1xf32>
    %26 = vector.broadcast %24 : vector<8x1xi32> to vector<8x32xi32>
    %27 = arith.cmpi eq, %20, %26 : vector<8x32xi32>
    %cst_15 = arith.constant 0.000000e+00 : f32
    %28 = vector.broadcast %cst_15 : f32 to vector<8x32xf32>
    %29 = arith.select %27, %3, %28 : vector<8x32xi1>, vector<8x32xf32>
    %cst_16 = arith.constant dense<0.000000e+00> : vector<8xf32>
    %30 = vector.multi_reduction <add>, %29, %cst_16 [1] : vector<8x32xf32> to vector<8xf32>
    %31 = vector.shape_cast %30 : vector<8xf32> to vector<8x1xf32>
    %32 = arith.addf %25, %31 : vector<8x1xf32>
    %c0_17 = arith.constant 0 : index
    %c0_18 = arith.constant 0 : index
    %33 = vector.load %arg7[%c0_17, %c0_18] : memref<8x1xf32, #tpu.memory_space<vmem>>, vector<8x1xf32>
    tpu.vector_store %arg7[%c0_17, %c0_18], %32 {strides = array<i32>} : memref<8x1xf32, #tpu.memory_space<vmem>>, vector<8x1xf32>,
    %c0_i32_19 = arith.constant 0 : i32
    %34 = arith.cmpi eq, %arg1, %c0_i32_19 : i32
    %35 = arith.extui %34 : i1 to i32
    %c0_i32_20 = arith.constant 0 : i32
    %36 = arith.cmpi ne, %35, %c0_i32_20 : i32
    scf.if %36 {
      %c0_21 = arith.constant 0 : index
      %c0_22 = arith.constant 0 : index
      %37 = vector.load %arg5[%c0_21, %c0_22] : memref<8x1xf32, #tpu.memory_space<vmem>>, vector<8x1xf32>
      %c0_23 = arith.constant 0 : index
      %c0_24 = arith.constant 0 : index
      %38 = vector.load %arg6[%c0_23, %c0_24] : memref<8x1xf32, #tpu.memory_space<vmem>>, vector<8x1xf32>
      %39 = math.log %38 : vector<8x1xf32>
      %40 = arith.addf %37, %39 : vector<8x1xf32>
      %c0_25 = arith.constant 0 : index
      %c0_26 = arith.constant 0 : index
      %41 = vector.load %arg7[%c0_25, %c0_26] : memref<8x1xf32, #tpu.memory_space<vmem>>, vector<8x1xf32>
      %42 = arith.subf %40, %41 : vector<8x1xf32>
      %cst_27 = arith.constant 0.000000e+00 : f32
      %43 = vector.broadcast %cst_27 : f32 to vector<8x1xf32>
      %44 = arith.subf %43, %42 : vector<8x1xf32>
      %45 = math.exp %44 : vector<8x1xf32>
      %cst_28 = arith.constant 1.000000e+00 : f32
      %46 = vector.broadcast %cst_28 : f32 to vector<8x1xf32>
      %47 = arith.mulf %46, %42 : vector<8x1xf32>
      %cst_29 = arith.constant 5.000000e-01 : f32
      %48 = vector.broadcast %cst_29 : f32 to vector<8x1xf32>
      %49 = arith.mulf %48, %45 : vector<8x1xf32>
      %50 = arith.mulf %49, %45 : vector<8x1xf32>
      %51 = arith.addf %45, %50 : vector<8x1xf32>
      %cst_30 = arith.constant 0.000000e+00 : f32
      %52 = vector.broadcast %cst_30 : f32 to vector<8x1xf32>
      %53 = arith.mulf %52, %51 : vector<8x1xf32>
      %54 = arith.subf %47, %53 : vector<8x1xf32>
      %c0_31 = arith.constant 0 : index
      %c0_32 = arith.constant 0 : index
      %55 = vector.load %arg4[%c0_31, %c0_32] : memref<8x1xf32, #tpu.memory_space<vmem>>, vector<8x1xf32>
      tpu.vector_store %arg4[%c0_31, %c0_32], %54 {strides = array<i32>} : memref<8x1xf32, #tpu.memory_space<vmem>>, vector<8x1xf32>,
    } else {
    }
    return
  }
  func.func @transform_0(%arg0: i32, %arg1: i32) -> (i32, i32) {
    %c0_i32 = arith.constant 0 : i32
    return %arg0, %arg1 : i32, i32
  }
  func.func @transform_1(%arg0: i32, %arg1: i32) -> (i32, i32) {
    %c0_i32 = arith.constant 0 : i32
    %c0_i32_0 = arith.constant 0 : i32
    return %arg0, %c0_i32 : i32, i32
  }
  func.func @transform_2(%arg0: i32, %arg1: i32) -> (i32, i32) {
    %c0_i32 = arith.constant 0 : i32
    %c0_i32_0 = arith.constant 0 : i32
    return %arg0, %c0_i32 : i32, i32
  }
}

</mosaic_0001>

<llo_original>
// kernel: tpu_custom_call.1
$region0: #{tpu_custom_call.1}
  #allocation0 [shape = 'u32[]', space=smem, size = 0x4, offset = 0x4, fixed_abs, tag = 'smem constant byte address 0x4 - core index']
  #allocation1 [shape = 'u32[72,128]{1,0:T(1,128)}', space=vmem, size = 0x9000, scoped, tag = 'internal scratch']
  #allocation2 [shape = 'f32[8,1]{1,0:T(8,128)}', space=vmem, size = 0x1000, scoped, tag = 'scratch operand']
  #allocation3 [shape = 'f32[8,1]{1,0:T(8,128)}', space=vmem, size = 0x1000, scoped, tag = 'scratch operand']
  #allocation4 [shape = 'f32[8,1]{1,0:T(8,128)}', space=vmem, size = 0x1000, scoped, tag = 'scratch operand']
  %s0 = inlined_call_operand.vmem [shape: f32[16,32], index: 0, kind: input, shape index: {}]
  %s1 = inlined_call_operand.vmem [shape: s32[16,1], index: 1, kind: input, shape index: {}]
  %s2 = inlined_call_operand.vmem [shape: f32[16,1], index: 2, kind: output, shape index: {}]
  %s3 = sld [smem:[#allocation0]]
  $region49: #{tpu_custom_call.1} parent=0
    _
  %s5 = ssub.s32 1, %s3
  %s6 = scalar_select 0, %s5, %s3
  loop: start=0, step=1, limit=4
  $region2: #{tpu_custom_call.1} parent=0 // loop_pre_header
    _
  $region3: #{tpu_custom_call.1} parent=0 // loop_header
    %s8 = sphi 0, %s12
    %p9 = scmp.ge.s32.totalorder %s8, 4
    %s15 = sphi 0, %s27
    %s16 = sphi 0, %s23
    %s17 = sphi 0, %s15
    %s18 = sphi 0, %s16
    %s19 = sphi 0, %s17
    %s20 = sphi 0, %s18
    %s32 = sphi 0, %s34
    %s35 = sphi 0, %s32
    %s36 = sphi 0, %s35
    %s52 = sphi 0, %s36
    %s58 = sphi 0, %s60
    %s61 = sphi 0, %s58
    %s62 = sphi 0, %s61
    %s78 = sphi 0, %s62
    %s84 = sphi 0, %s86
    %s87 = sphi 0, %s84
    %s88 = sphi 0, %s87
    %s104 = sphi 0, %s88
  $region4: #{tpu_custom_call.1} parent=0 // loop_header_branch
    %11 = sbr.rel (%p9) target = $region8
  $region5: #{tpu_custom_call.1} parent=0 // loop_body
    %s13 = ssub.s32 %s8, 1
    %s14 = ssub.s32 %s8, 2
    %s21 = sadd.s32 1, %s16
    %p22 = scmp.ge.s32.totalorder %s21, 1
    %s23 = scalar_select %p22, 0, %s21
    %s24 = sadd.s32 1, %s15
    %s25 = scalar_select %p22, %s24, %s15
    %p26 = scmp.ge.s32.totalorder %s25, 2
    %s27 = scalar_select %p26, 0, %s25
    %s28 = ssub.s32 %s15, %s27
    %s29 = ssub.s32 %s16, %s23
    %s30 = sor.u32 %s28, %s29
    %p31 = scmp.eq.s32.totalorder %s30, 0
    %s33 = sadd.s32 %s32, 1
    %s34 = scalar_select %p31, %s32, %s33
    %p37 = pneg %p31
    %p38 = scmp.eq.s32.totalorder %s8, 1
    %p39 = por %p37, %p38
    %p40 = scmp.ne.s32.totalorder %s32, %s35
    %p41 = scmp.eq.s32.totalorder %s8, 0
    %p42 = por %p40, %p41
    %p43 = scmp.ne.s32.totalorder %s32, %s35
    %p44 = scmp.eq.s32.totalorder %s13, 1
    %p45 = por %p43, %p44
    %p46 = scmp.ne.s32.totalorder %s35, %s36
    %p47 = scmp.eq.s32.totalorder %s13, 0
    %p48 = por %p46, %p47
    %p49 = scmp.ne.s32.totalorder %s35, %s36
    %p50 = scmp.eq.s32.totalorder %s14, 1
    %p51 = por %p49, %p50
    %p53 = scmp.ne.s32.totalorder %s36, %s52
    %p54 = scmp.eq.s32.totalorder %s14, 0
    %p55 = por %p53, %p54
    %s56 = ssub.s32 %s15, %s27
    %p57 = scmp.eq.s32.totalorder %s56, 0
    %s59 = sadd.s32 %s58, 1
    %s60 = scalar_select %p57, %s58, %s59
    %p63 = pneg %p57
    %p64 = scmp.eq.s32.totalorder %s8, 1
    %p65 = por %p63, %p64
    %p66 = scmp.ne.s32.totalorder %s58, %s61
    %p67 = scmp.eq.s32.totalorder %s8, 0
    %p68 = por %p66, %p67
    %p69 = scmp.ne.s32.totalorder %s58, %s61
    %p70 = scmp.eq.s32.totalorder %s13, 1
    %p71 = por %p69, %p70
    %p72 = scmp.ne.s32.totalorder %s61, %s62
    %p73 = scmp.eq.s32.totalorder %s13, 0
    %p74 = por %p72, %p73
    %p75 = scmp.ne.s32.totalorder %s61, %s62
    %p76 = scmp.eq.s32.totalorder %s14, 1
    %p77 = por %p75, %p76
    %p79 = scmp.ne.s32.totalorder %s62, %s78
    %p80 = scmp.eq.s32.totalorder %s14, 0
    %p81 = por %p79, %p80
    %s82 = ssub.s32 %s15, %s27
    %p83 = scmp.eq.s32.totalorder %s82, 0
    %s85 = sadd.s32 %s84, 1
    %s86 = scalar_select %p83, %s84, %s85
    %p89 = pneg %p83
    %p90 = scmp.eq.s32.totalorder %s8, 1
    %p91 = por %p89, %p90
    %p92 = scmp.ne.s32.totalorder %s84, %s87
    %p93 = scmp.eq.s32.totalorder %s8, 0
    %p94 = por %p92, %p93
    %p95 = scmp.ne.s32.totalorder %s84, %s87
    %p96 = scmp.eq.s32.totalorder %s13, 1
    %p97 = por %p95, %p96
    %p98 = scmp.ne.s32.totalorder %s87, %s88
    %p99 = scmp.eq.s32.totalorder %s13, 0
    %p100 = por %p98, %p99
    %p101 = scmp.ne.s32.totalorder %s87, %s88
    %p102 = scmp.eq.s32.totalorder %s14, 1
    %p103 = por %p101, %p102
    %p105 = scmp.ne.s32.totalorder %s88, %s104
    %p106 = scmp.eq.s32.totalorder %s14, 0
    %p107 = por %p105, %p106
    %p108 = scmp.le.s32.totalorder 1, %s8
    %p109 = scmp.lt.s32.totalorder %s8, 3
    %p110 = pnand %p108, %p109
    %p111 = pneg %p110
    // Predicated region
    $region9: #{tpu_custom_call.1} parent=5 // pred_check
      _
    $region10: #{tpu_custom_call.1} parent=5 // pred_check_branch
      %113 = sbr.rel (%p110) target = $region12
    $region11: #{tpu_custom_call.1} parent=5 // pred_region
      %s114 = ssub.s32 %s8, 1
    $region12: #{tpu_custom_call.1} parent=5 // pred_fallthru
      _
    %p115 = scmp.lt.s32.totalorder %s8, 2
    // Predicated region
    $region13: #{tpu_custom_call.1} parent=5 // pred_check
      %p116 = pneg %p115
    $region14: #{tpu_custom_call.1} parent=5 // pred_check_branch
      %118 = sbr.rel (%p116) target = $region16
    $region15: #{tpu_custom_call.1} parent=5 // pred_region
      // Predicated region
      $region17: #{tpu_custom_call.1} parent=15 // pred_check
        %p119 = pneg %p42
      $region18: #{tpu_custom_call.1} parent=15 // pred_check_branch
        %121 = sbr.rel (%p119) target = $region20
      $region19: #{tpu_custom_call.1} parent=15 // pred_region
        %p122 = scmp.lt.s32.totalorder %s15, 1
        %s123 = scalar_select %p122, %s15, 1
        %p124 = scmp.lt.s32.totalorder %s16, 0
        %s125 = scalar_select %p124, %s16, 0
        %s126 = sadd.s32 %s125, %s123
        %s127 = smul.addr %s126, 8
        %s128 = scalar_lea.vmem %s0, %s127
      $region20: #{tpu_custom_call.1} parent=15 // pred_fallthru
        _
      // Predicated region
      $region21: #{tpu_custom_call.1} parent=15 // pred_check
        %p129 = pneg %p68
      $region22: #{tpu_custom_call.1} parent=15 // pred_check_branch
        %131 = sbr.rel (%p129) target = $region24
      $region23: #{tpu_custom_call.1} parent=15 // pred_region
        %p132 = scmp.lt.s32.totalorder %s15, 1
        %s133 = scalar_select %p132, %s15, 1
        %s134 = smul.addr %s133, 8
        %s135 = scalar_lea.vmem %s1, %s134
      $region24: #{tpu_custom_call.1} parent=15 // pred_fallthru
        _
    $region16: #{tpu_custom_call.1} parent=5 // pred_fallthru
      _
    %p136 = scmp.le.s32.totalorder 1, %s8
    %p137 = scmp.lt.s32.totalorder %s8, 3
    %p138 = pnand %p136, %p137
    %p139 = pneg %p138
    // Predicated region
    $region25: #{tpu_custom_call.1} parent=5 // pred_check
      _
    $region26: #{tpu_custom_call.1} parent=5 // pred_check_branch
      %141 = sbr.rel (%p138) target = $region28
    $region27: #{tpu_custom_call.1} parent=5 // pred_region
      %s142 = ssub.s32 %s8, 1
      %p143 = scmp.lt.s32.totalorder %s17, 1
      %s144 = scalar_select %p143, %s17, 1
      %p145 = scmp.lt.s32.totalorder %s18, 0
      %s146 = scalar_select %p145, %s18, 0
      %s147 = sadd.s32 %s146, %s144
      %s148 = smul.addr %s147, 8
      %s149 = scalar_lea.vmem %s0, %s148
      %p150 = pneg %p48
      %p151 = pneg %p45
      %p152 = scmp.lt.s32.totalorder %s17, 1
      %s153 = scalar_select %p152, %s17, 1
      %s154 = smul.addr %s153, 8
      %s155 = scalar_lea.vmem %s1, %s154
      %p156 = pneg %p74
      %p157 = pneg %p71
      %p158 = pneg %p100
      %p159 = pneg %p97
      %p160 = scmp.lt.s32.totalorder %s17, 1
      %s161 = scalar_select %p160, %s17, 1
      %s162 = smul.addr %s161, 8
      %s163 = scalar_lea.vmem %s2, %s162
      %p164 = scmp.lt.s32.totalorder %s17, 1
      %s165 = scalar_select %p164, %s17, 1
      %p166 = scmp.lt.s32.totalorder %s18, 0
      %s167 = scalar_select %p166, %s18, 0
      %s168 = sadd.s32 %s167, %s165
      %s169 = smul.addr %s168, 8
      %s170 = scalar_lea.vmem %s0, %s169
      %p171 = scmp.lt.s32.totalorder %s17, 1
      %s172 = scalar_select %p171, %s17, 1
      %s173 = smul.addr %s172, 8
      %s174 = scalar_lea.vmem %s1, %s173
      %p175 = scmp.lt.s32.totalorder %s17, 1
      %s176 = scalar_select %p175, %s17, 1
      %s177 = smul.addr %s176, 8
      %s178 = scalar_lea.vmem %s2, %s177
      %p179 = scmp.eq.s32.totalorder %s18, 0
      // Predicated region
      $region29: #{tpu_custom_call.1} parent=27 // pred_check
        %p180 = pneg %p179
      $region30: #{tpu_custom_call.1} parent=27 // pred_check_branch
        %182 = sbr.rel (%p180) target = $region32
      $region31: #{tpu_custom_call.1} parent=27 // pred_region
        %vm183 = vcmask 7168
        %184 = vst.msk [vmem:[#allocation2] sm:$0xff] %vm183, -inf
        %185 = vst.msk [vmem:[#allocation3] sm:$0xff] %vm183, 0.0
        %186 = vst.msk [vmem:[#allocation4] sm:$0xff] %vm183, 0.0
      $region32: #{tpu_custom_call.1} parent=27 // pred_fallthru
        _
      %v187 = vld [vmem:[%s170] sm:$0xff]
      %vm188 = vcmask 261120
      %v189 = vsel %vm188, %v187, -inf
      %190 = vmax.xlane.f32.xlu0 %v189
      %v191 = vpop.xlane.xlu0 %190
      %v192 = vld [vmem:[#allocation2] sm:$0xff]
      %v193 = vmax.f32 %v192, %v191
      %v194 = vld [vmem:[#allocation3] sm:$0xff]
      %v195 = vsub.f32 %v192, %v193
      %v196 = vmul.f32 %v195, 1.442695
      %v197 = vpow.pop %v196
      %v198 = vmul.f32 %v194, %v197
      %200 = vset.pattern.permute.xlu0 0
      %201 = vperm.xlu0 %200, %v193
      %v202 = vpop.permute.xlu0 %201
      %v204 = vsub.f32 %v187, %v202
      %v205 = vmul.f32 %v204, 1.442695
      %v206 = vpow.pop %v205
      %v207 = vsel %vm188, %v206, 0.0
      %208 = vadd.xlane.f32.xlu0 %v207
      %v209 = vpop.xlane.xlu0 %208
      %v210 = vadd.f32 %v198, %v209
      %vm211 = vcmask 7168
      %212 = vst.msk [vmem:[#allocation3] sm:$0xff] %vm211, %v210
      %213 = vst.msk [vmem:[#allocation2] sm:$0xff] %vm211, %v193
      %v214 = vlaneseq
      %v215 = vand.u32 %v214, 127
      %v216 = vld [vmem:[%s174] sm:$0xff]
      %s217 = smul.u32 %s18, 32
      %v218 = vstv %s217
      %v219 = vsub.s32 %v216, %v218
      %v220 = vld [vmem:[#allocation4] sm:$0xff]
      %221 = vset.pattern.permute.xlu0 0
      %222 = vperm.xlu0 %221, %v219
      %v223 = vpop.permute.xlu0 %222
      %vm224 = vcmp.eq.s32.totalorder %v215, %v223
      %v225 = vsel %vm224, %v187, 0.0
      %v226 = vsel %vm188, %v225, 0.0
      %227 = vadd.xlane.f32.xlu0 %v226
      %v228 = vpop.xlane.xlu0 %227
      %v229 = vadd.f32 %v220, %v228
      %230 = vst.msk [vmem:[#allocation4] sm:$0xff] %vm211, %v229
      // Predicated region
      $region33: #{tpu_custom_call.1} parent=27 // pred_check
        %p231 = pneg %p179
      $region34: #{tpu_custom_call.1} parent=27 // pred_check_branch
        %233 = sbr.rel (%p231) target = $region36
      $region35: #{tpu_custom_call.1} parent=27 // pred_region
        %v234 = vld [vmem:[#allocation2] sm:$0xff]
        %v235 = vld [vmem:[#allocation3] sm:$0xff]
        %v236 = vlog2.pop %v235
        %v237 = vmul.f32 %v236, 0.6931472
        %v238 = vadd.f32 %v234, %v237
        %v239 = vld [vmem:[#allocation4] sm:$0xff]
        %v240 = vsub.f32 %v238, %v239
        %v241 = vsub.f32 0.0, %v240
        %v242 = vmul.f32 %v241, 1.442695
        %v243 = vpow.pop %v242
        %v244 = vmul.f32 %v243, 0.5
        %v245 = vmul.f32 %v244, %v243
        %v246 = vadd.f32 %v243, %v245
        %v247 = vmul.f32 %v246, 0.0
        %v248 = vsub.f32 %v240, %v247
        %249 = vst.msk [vmem:[%s178] sm:$0xff] %vm211, %v248
      $region36: #{tpu_custom_call.1} parent=27 // pred_fallthru
        _
      %p250 = scmp.lt.s32.totalorder %s17, 1
      %s251 = scalar_select %p250, %s17, 1
      %s252 = smul.addr %s251, 8
      %s253 = scalar_lea.vmem %s2, %s252
      // Predicated region
      $region37: #{tpu_custom_call.1} parent=27 // pred_check
        %p254 = pneg %p97
      $region38: #{tpu_custom_call.1} parent=27 // pred_check_branch
        %256 = sbr.rel (%p254) target = $region40
      $region39: #{tpu_custom_call.1} parent=27 // pred_region
        _
      $region40: #{tpu_custom_call.1} parent=27 // pred_fallthru
        _
    $region28: #{tpu_custom_call.1} parent=5 // pred_fallthru
      _
    %p257 = scmp.le.s32.totalorder 2, %s8
    // Predicated region
    $region41: #{tpu_custom_call.1} parent=5 // pred_check
      %p258 = pneg %p257
    $region42: #{tpu_custom_call.1} parent=5 // pred_check_branch
      %260 = sbr.rel (%p258) target = $region44
    $region43: #{tpu_custom_call.1} parent=5 // pred_region
      %s261 = ssub.s32 %s8, 2
      // Predicated region
      $region45: #{tpu_custom_call.1} parent=43 // pred_check
        %p262 = pneg %p103
      $region46: #{tpu_custom_call.1} parent=43 // pred_check_branch
        %264 = sbr.rel (%p262) target = $region48
      $region47: #{tpu_custom_call.1} parent=43 // pred_region
        %p265 = scmp.lt.s32.totalorder %s19, 1
        %s266 = scalar_select %p265, %s19, 1
        %s267 = smul.addr %s266, 8
        %s268 = scalar_lea.vmem %s2, %s267
      $region48: #{tpu_custom_call.1} parent=43 // pred_fallthru
        _
    $region44: #{tpu_custom_call.1} parent=5 // pred_fallthru
      _
  $region6: #{tpu_custom_call.1} parent=0 // loop_footer
    %s12 = sadd.s32 1, %s8
  $region7: #{tpu_custom_call.1} parent=0 // loop_footer_branch
    %7 = sbr.rel target = $region3
  $region8: #{tpu_custom_call.1} parent=0 // loop_exit
    _

</llo_original>
